<compile_context>
chip_gen: v5e
topology: v5e:2x2
jax: 0.10.0
libtpu: 0.0.40
codegen_flags: <defaults>
</compile_context>

<pallas_src>
from functools import partial

import jax
import jax.numpy as jnp
import numpy as np
from jax.experimental import pallas as pl
from jax.experimental.pallas import tpu as pltpu


def _router_kernel(x_ref, w_ref, bn_ref, sparse_ref, idx_ref, *, topk, n_experts):
    E = n_experts
    tm = x_ref.shape[0]

    # logits = x @ W + (bias [+ noise]); f32 accumulation on the MXU.
    logits = jnp.dot(x_ref[...], w_ref[...], preferred_element_type=jnp.float32)
    logits = logits + bn_ref[...]

    # Softmax numerator; normalization deferred to the end (top-k selection is
    # monotone-invariant under the positive scale 1/sum).
    m = jnp.max(logits, axis=-1, keepdims=True)
    e = jnp.exp(logits - m)
    row_sum = jnp.sum(e, axis=-1, keepdims=True)

    # Pack value|priority in the low mantissa bits so one f32 lane max-reduce per
    # top-k step yields both the max and its argmax (lowest expert index wins ties).
    expert_ids = jax.lax.broadcasted_iota(jnp.int32, (1, E), 1)      # single vreg
    nbits = max(1, (E - 1).bit_length())
    lo_mask = (1 << nbits) - 1
    prio = (E - 1) - expert_ids                                      # higher = lower index
    bits = pltpu.bitcast(e, jnp.int32)                               # monotone for x >= 0
    bits = (bits & jnp.int32(~lo_mask)) | prio
    packed = pltpu.bitcast(bits, jnp.float32)

    mask = jnp.zeros(e.shape, jnp.bool_)                             # selected-expert mask
    idx_cols = []
    for _ in range(topk):
        pmax = jnp.max(packed, axis=-1, keepdims=True)               # 1 XLU reduce / step
        pbits = pltpu.bitcast(pmax, jnp.int32)
        idx = (E - 1) - (pbits & jnp.int32(lo_mask))                 # (tm, 1) argmax
        onehot = expert_ids == idx                                   # (tm, E) via broadcast
        mask = jnp.logical_or(mask, onehot)
        packed = jnp.where(onehot, -jnp.inf, packed)                 # mask for next step
        idx_cols.append(idx)

    # One reciprocal per row (EUP slot) + a single scale/select of the output tile.
    inv = pl.reciprocal(row_sum, approx=False)
    sparse_ref[...] = jnp.where(mask, e * inv, 0.0).astype(sparse_ref.dtype)

    # Assemble the (tm, topk) index slab once, after the loop (tiny selects).
    lane = jax.lax.broadcasted_iota(jnp.int32, (1, topk), 1)
    idx_out = jnp.zeros((tm, topk), jnp.int32)
    for j in range(topk):
        idx_out = jnp.where(lane == j, idx_cols[j], idx_out)
    idx_ref[...] = idx_out


def _round_up(v, m):
    return ((v + m - 1) // m) * m


def _vmem_capacity_bytes():
    try:
        return int(pltpu.get_tpu_info().vmem_capacity_bytes)
    except Exception:
        return 64 * 1024 * 1024  # conservative (v7x per-TC) fallback


def _num_tensorcores():
    try:
        info = pltpu.get_tpu_info()
        for attr in ("num_cores", "core_count", "num_tensorcores", "tensorcores_per_chip"):
            v = getattr(info, attr, None)
            if isinstance(v, int) and v > 0:
                return v
    except Exception:
        pass
    try:
        if "v7" in jax.devices()[0].device_kind.lower():
            return 2
    except Exception:
        pass
    return 1


def _const_block_spec(shape):
    # Constant block (index_map always (0, 0)) -> single-buffer it to save VMEM.
    try:
        return pl.BlockSpec(shape, lambda i: (0, 0), pipeline_mode=pl.Buffered(1))
    except Exception:
        return pl.BlockSpec(shape, lambda i: (0, 0))


def _forward(x, w, b, noise_key=None, *, topk, training=False):
    """x: (..., D) (any float dtype), w: (D, E) (transpose of torch nn.Linear weight),
    b: (E,) -> (sparse_logits (..., E) x.dtype, topk_indices (..., topk) int32)."""
    lead = x.shape[:-1]
    D = x.shape[-1]
    x2 = x.reshape(-1, D)
    N = x2.shape[0]
    E = w.shape[1]
    assert topk <= E

    # Fold training noise (one (E,) N(0, 1/E) vector, broadcast over tokens) into bias.
    bvec = b.astype(jnp.float32)
    if training:
        bvec = bvec + jax.random.normal(noise_key, (E,), dtype=jnp.float32) / E
    bn = bvec.reshape(1, E)
    w_c = w.astype(x2.dtype)  # bf16 x -> bf16 weights -> native MXU rate; f32 x -> exact

    # ---- VMEM-budgeted row tile (per TPU generation) ----
    bpe = jnp.dtype(x2.dtype).itemsize
    vmem_cap = _vmem_capacity_bytes()
    budget = (vmem_cap * 3) // 8
    fixed = bpe * D * E + 4 * E                                        # single-buffered w + bias
    per_row = 2 * bpe * D + 2 * 4 * E + 2 * 4 * topk + 8 * 4 * E       # x (x2 buf), outs (x2), temps
    tm = (budget - fixed) // max(per_row, 1)
    tm = int(max(8, min(4096, (tm // 8) * 8)))

    cores = _num_tensorcores()
    if cores >= 2 and N >= 16:
        # >= 2 grid steps per TensorCore (v7x) for core sharding + pipeline overlap;
        # single-TC chips keep the largest VMEM-fitting tile (fewer grid-step overheads).
        tm = min(tm, max(8, _round_up(-(-N // (2 * cores)), 8)))
    tm = min(tm, _round_up(N, 8))

    grid = (pl.cdiv(N, tm),)  # ragged last row tile is masked by Pallas (no N padding)

    est = fixed + per_row * tm
    vmem_limit = int(min((vmem_cap * 3) // 4, max(32 << 20, est + (8 << 20))))

    kernel = partial(_router_kernel, topk=topk, n_experts=E)
    sparse, idx = pl.pallas_call(
        kernel,
        out_shape=(
            jax.ShapeDtypeStruct((N, E), x2.dtype),
            jax.ShapeDtypeStruct((N, topk), jnp.int32),
        ),
        grid_spec=pltpu.PrefetchScalarGridSpec(
            num_scalar_prefetch=0,
            grid=grid,
            in_specs=[
                pl.BlockSpec((tm, D), lambda i: (i, 0)),   # x row tile (native dtype)
                _const_block_spec((D, E)),                 # weight (constant block)
                _const_block_spec((1, E)),                 # bias + noise (constant block)
            ],
            out_specs=[
                pl.BlockSpec((tm, E), lambda i: (i, 0)),       # sparse logits, no slicing needed
                pl.BlockSpec((tm, topk), lambda i: (i, 0)),    # top-k indices, no slicing needed
            ],
        ),
        compiler_params=pltpu.CompilerParams(
            dimension_semantics=("parallel",),
            vmem_limit_bytes=vmem_limit,
        ),
    )(x2, w_c, bn)

    return sparse.reshape(lead + (E,)), idx.reshape(lead + (topk,))


# jit the whole forward: caches tile-size derivation / weight-bias prep per shape.
topk_router_forward = jax.jit(_forward, static_argnames=("topk", "training"))


def _reference(x, w, b, topk):
    logits = x @ w + b[None, :]
    probs = jax.nn.softmax(logits, axis=-1)
    topv, topi = jax.lax.top_k(probs, topk)
    sparse = jnp.zeros_like(probs)
    sparse = sparse.at[jnp.arange(x.shape[0])[:, None], topi].set(topv)
    return sparse, topi.astype(jnp.int32)


if __name__ == "__main__":
    N, D, E, TOPK = 16, 32, 8, 2  # tokens, input_dim, n_experts, topk

    key = jax.random.PRNGKey(0)
    kx, kw, kb = jax.random.split(key, 3)

    # deterministic parameter init (nn.Linear-style uniform(-1/sqrt(D), 1/sqrt(D)))
    bound = 1.0 / float(np.sqrt(D))
    w = jax.random.uniform(kw, (D, E), jnp.float32, minval=-bound, maxval=bound)
    b = jax.random.uniform(kb, (E,), jnp.float32, minval=-bound, maxval=bound)
    x = jax.random.normal(kx, (N, D), dtype=jnp.float32)

    # eval path (training=False): matches the torch forward
    sparse, idx = topk_router_forward(x, w, b, topk=TOPK, training=False)
    jax.block_until_ready((sparse, idx))

    # correctness check against plain-JAX reference
    sparse_ref, idx_ref = _reference(x, w, b, TOPK)
    assert np.allclose(np.asarray(sparse), np.asarray(sparse_ref), atol=1e-5), "sparse mismatch"
    assert np.array_equal(np.asarray(idx), np.asarray(idx_ref)), "index mismatch"

    # training path (noise folded into bias deterministically; aux stats are module state, see TODO)
    sparse_tr, idx_tr = topk_router_forward(
        x, w, b, noise_key=jax.random.PRNGKey(1), topk=TOPK, training=True
    )
    jax.block_until_ready((sparse_tr, idx_tr))

    print("KERNEL_OK")
</pallas_src>

<mosaic_0001>
module attributes {stable_mosaic.version = 11 : i64} {
  func.func @_router_kernel(%arg0: i32, %arg1: memref<16x32xf32, #tpu.memory_space<vmem>>, %arg2: memref<32x8xf32, #tpu.memory_space<vmem>>, %arg3: memref<1x8xf32, #tpu.memory_space<vmem>>, %arg4: memref<16x8xf32, #tpu.memory_space<vmem>>, %arg5: memref<16x2xi32, #tpu.memory_space<vmem>>) attributes {dimension_semantics = [#tpu.dimension_semantics<parallel>], iteration_bounds = array<i64: 1>, scalar_prefetch = 0 : i64, scratch_operands = 0 : i64, tpu.core_type = #tpu.core_type<tc>, window_params = [{transform_indices = @transform_0, window_bounds = array<i64: 16, 32>}, {pipeline_mode = #tpu.pipeline_mode<synchronous>, transform_indices = @transform_1, window_bounds = array<i64: 32, 8>}, {pipeline_mode = #tpu.pipeline_mode<synchronous>, transform_indices = @transform_2, window_bounds = array<i64: 1, 8>}, {transform_indices = @transform_3, window_bounds = array<i64: 16, 8>}, {transform_indices = @transform_4, window_bounds = array<i64: 16, 2>}]} {
    %c0 = arith.constant 0 : index
    %c0_0 = arith.constant 0 : index
    %0 = vector.load %arg1[%c0, %c0_0] : memref<16x32xf32, #tpu.memory_space<vmem>>, vector<16x32xf32>
    %c0_1 = arith.constant 0 : index
    %c0_2 = arith.constant 0 : index
    %1 = vector.load %arg2[%c0_1, %c0_2] : memref<32x8xf32, #tpu.memory_space<vmem>>, vector<32x8xf32>
    %cst = arith.constant dense<0.000000e+00> : vector<16x8xf32>
    %2 = tpu.matmul %0, %1, %cst {dimension_numbers = #tpu.dot_dimension_numbers<[1], [0], [0], [1], [0, 0, 1, 1], [], []>} : vector<16x32xf32>, vector<32x8xf32>, vector<16x8xf32> -> vector<16x8xf32>
    %c0_3 = arith.constant 0 : index
    %c0_4 = arith.constant 0 : index
    %3 = vector.load %arg3[%c0_3, %c0_4] : memref<1x8xf32, #tpu.memory_space<vmem>>, vector<1x8xf32>
    %4 = vector.broadcast %3 : vector<1x8xf32> to vector<16x8xf32>
    %5 = arith.addf %2, %4 : vector<16x8xf32>
    %cst_5 = arith.constant dense<0xFF800000> : vector<16xf32>
    %6 = vector.multi_reduction <maximumf>, %5, %cst_5 [1] : vector<16x8xf32> to vector<16xf32>
    %7 = vector.shape_cast %6 : vector<16xf32> to vector<16x1xf32>
    %8 = vector.broadcast %7 : vector<16x1xf32> to vector<16x8xf32>
    %9 = arith.subf %5, %8 : vector<16x8xf32>
    %10 = math.exp %9 : vector<16x8xf32>
    %cst_6 = arith.constant dense<0.000000e+00> : vector<16xf32>
    %11 = vector.multi_reduction <add>, %10, %cst_6 [1] : vector<16x8xf32> to vector<16xf32>
    %12 = vector.shape_cast %11 : vector<16xf32> to vector<16x1xf32>
    %13 = tpu.iota {dimensions = array<i32: 1>} : vector<1x8xi32>
    %c7_i32 = arith.constant 7 : i32
    %14 = vector.broadcast %c7_i32 : i32 to vector<1x8xi32>
    %15 = arith.subi %14, %13 : vector<1x8xi32>
    %16 = tpu.bitcast %10 : vector<16x8xf32> -> vector<16x8xi32>
    %c-8_i32 = arith.constant -8 : i32
    %17 = vector.broadcast %c-8_i32 : i32 to vector<16x8xi32>
    %18 = arith.andi %16, %17 : vector<16x8xi32>
    %19 = vector.broadcast %15 : vector<1x8xi32> to vector<16x8xi32>
    %20 = arith.ori %18, %19 : vector<16x8xi32>
    %21 = tpu.bitcast %20 : vector<16x8xi32> -> vector<16x8xf32>
    %false = arith.constant false
    %22 = vector.broadcast %false : i1 to vector<16x8xi1>
    %cst_7 = arith.constant dense<0xFF800000> : vector<16xf32>
    %23 = vector.multi_reduction <maximumf>, %21, %cst_7 [1] : vector<16x8xf32> to vector<16xf32>
    %24 = vector.shape_cast %23 : vector<16xf32> to vector<16x1xf32>
    %25 = tpu.bitcast %24 : vector<16x1xf32> -> vector<16x1xi32>
    %c7_i32_8 = arith.constant 7 : i32
    %26 = vector.broadcast %c7_i32_8 : i32 to vector<16x1xi32>
    %27 = arith.andi %25, %26 : vector<16x1xi32>
    %c7_i32_9 = arith.constant 7 : i32
    %28 = vector.broadcast %c7_i32_9 : i32 to vector<16x1xi32>
    %29 = arith.subi %28, %27 : vector<16x1xi32>
    %30 = vector.broadcast %13 : vector<1x8xi32> to vector<16x8xi32>
    %31 = vector.broadcast %29 : vector<16x1xi32> to vector<16x8xi32>
    %32 = arith.cmpi eq, %30, %31 : vector<16x8xi32>
    %33 = arith.ori %22, %32 : vector<16x8xi1>
    %cst_10 = arith.constant 0xFF800000 : f32
    %34 = vector.broadcast %cst_10 : f32 to vector<16x8xf32>
    %35 = arith.select %32, %34, %21 : vector<16x8xi1>, vector<16x8xf32>
    %cst_11 = arith.constant dense<0xFF800000> : vector<16xf32>
    %36 = vector.multi_reduction <maximumf>, %35, %cst_11 [1] : vector<16x8xf32> to vector<16xf32>
    %37 = vector.shape_cast %36 : vector<16xf32> to vector<16x1xf32>
    %38 = tpu.bitcast %37 : vector<16x1xf32> -> vector<16x1xi32>
    %c7_i32_12 = arith.constant 7 : i32
    %39 = vector.broadcast %c7_i32_12 : i32 to vector<16x1xi32>
    %40 = arith.andi %38, %39 : vector<16x1xi32>
    %c7_i32_13 = arith.constant 7 : i32
    %41 = vector.broadcast %c7_i32_13 : i32 to vector<16x1xi32>
    %42 = arith.subi %41, %40 : vector<16x1xi32>
    %43 = vector.broadcast %13 : vector<1x8xi32> to vector<16x8xi32>
    %44 = vector.broadcast %42 : vector<16x1xi32> to vector<16x8xi32>
    %45 = arith.cmpi eq, %43, %44 : vector<16x8xi32>
    %46 = arith.ori %33, %45 : vector<16x8xi1>
    %47 = tpu.reciprocal %12 : vector<16x1xf32> -> vector<16x1xf32>
    %48 = vector.broadcast %47 : vector<16x1xf32> to vector<16x8xf32>
    %49 = arith.mulf %10, %48 : vector<16x8xf32>
    %cst_14 = arith.constant 0.000000e+00 : f32
    %50 = vector.broadcast %cst_14 : f32 to vector<16x8xf32>
    %51 = arith.select %46, %49, %50 : vector<16x8xi1>, vector<16x8xf32>
    %c0_15 = arith.constant 0 : index
    %c0_16 = arith.constant 0 : index
    %52 = vector.load %arg4[%c0_15, %c0_16] : memref<16x8xf32, #tpu.memory_space<vmem>>, vector<16x8xf32>
    tpu.vector_store %arg4[%c0_15, %c0_16], %51 {strides = array<i32>} : memref<16x8xf32, #tpu.memory_space<vmem>>, vector<16x8xf32>,
    %53 = tpu.iota {dimensions = array<i32: 1>} : vector<1x2xi32>
    %c0_i32 = arith.constant 0 : i32
    %54 = vector.broadcast %c0_i32 : i32 to vector<16x2xi32>
    %c0_i32_17 = arith.constant 0 : i32
    %55 = vector.broadcast %c0_i32_17 : i32 to vector<1x2xi32>
    %56 = arith.cmpi eq, %53, %55 : vector<1x2xi32>
    %57 = vector.shape_cast %56 : vector<1x2xi1> to vector<1x2xi1>
    %58 = vector.broadcast %57 : vector<1x2xi1> to vector<16x2xi1>
    %59 = vector.shape_cast %29 : vector<16x1xi32> to vector<16x1xi32>
    %60 = vector.broadcast %59 : vector<16x1xi32> to vector<16x2xi32>
    %61 = arith.select %58, %60, %54 : vector<16x2xi1>, vector<16x2xi32>
    %c1_i32 = arith.constant 1 : i32
    %62 = vector.broadcast %c1_i32 : i32 to vector<1x2xi32>
    %63 = arith.cmpi eq, %53, %62 : vector<1x2xi32>
    %64 = vector.shape_cast %63 : vector<1x2xi1> to vector<1x2xi1>
    %65 = vector.broadcast %64 : vector<1x2xi1> to vector<16x2xi1>
    %66 = vector.shape_cast %42 : vector<16x1xi32> to vector<16x1xi32>
    %67 = vector.broadcast %66 : vector<16x1xi32> to vector<16x2xi32>
    %68 = arith.select %65, %67, %61 : vector<16x2xi1>, vector<16x2xi32>
    %c0_18 = arith.constant 0 : index
    %c0_19 = arith.constant 0 : index
    %69 = vector.load %arg5[%c0_18, %c0_19] : memref<16x2xi32, #tpu.memory_space<vmem>>, vector<16x2xi32>
    tpu.vector_store %arg5[%c0_18, %c0_19], %68 {strides = array<i32>} : memref<16x2xi32, #tpu.memory_space<vmem>>, vector<16x2xi32>,
    return
  }
  func.func @transform_0(%arg0: i32) -> (i32, i32) {
    %c0_i32 = arith.constant 0 : i32
    %c0_i32_0 = arith.constant 0 : i32
    return %arg0, %c0_i32 : i32, i32
  }
  func.func @transform_1(%arg0: i32) -> (i32, i32) {
    %c0_i32 = arith.constant 0 : i32
    %c0_i32_0 = arith.constant 0 : i32
    %c0_i32_1 = arith.constant 0 : i32
    return %c0_i32, %c0_i32_0 : i32, i32
  }
  func.func @transform_2(%arg0: i32) -> (i32, i32) {
    %c0_i32 = arith.constant 0 : i32
    %c0_i32_0 = arith.constant 0 : i32
    %c0_i32_1 = arith.constant 0 : i32
    return %c0_i32, %c0_i32_0 : i32, i32
  }
  func.func @transform_3(%arg0: i32) -> (i32, i32) {
    %c0_i32 = arith.constant 0 : i32
    %c0_i32_0 = arith.constant 0 : i32
    return %arg0, %c0_i32 : i32, i32
  }
  func.func @transform_4(%arg0: i32) -> (i32, i32) {
    %c0_i32 = arith.constant 0 : i32
    %c0_i32_0 = arith.constant 0 : i32
    return %arg0, %c0_i32 : i32, i32
  }
}

</mosaic_0001>

<llo_original>
// kernel: _forward.1
$region0: #{_forward.1}
  #allocation0 [shape = 'u32[]', space=smem, size = 0x4, offset = 0x4, fixed_abs, tag = 'smem constant byte address 0x4 - core index']
  #allocation1 [shape = 'u32[72,128]{1,0:T(1,128)}', space=vmem, size = 0x9000, scoped, tag = 'internal scratch']
  %s0 = inlined_call_operand.vmem [shape: f32[16,32], index: 0, kind: input, shape index: {}]
  %s1 = inlined_call_operand.vmem [shape: f32[32,8], index: 1, kind: input, shape index: {}]
  %s2 = inlined_call_operand.vmem [shape: f32[1,8], index: 2, kind: input, shape index: {}]
  %s3 = inlined_call_operand.vmem [shape: f32[16,8], index: 3, kind: output, shape index: {0}]
  %s4 = inlined_call_operand.vmem [shape: s32[16,2], index: 4, kind: output, shape index: {1}]
  %5 = xla_tuple %s3, %s4
  %s6 = sld [smem:[#allocation0]]
  $region30: #{_forward.1} parent=0
    _
  %s8 = ssub.s32 1, %s6
  %s9 = scalar_select 0, %s8, %s6
  // Predicated region
  $region2: #{_forward.1} parent=0 // pred_check
    _
  $region3: #{_forward.1} parent=0 // pred_check_branch
    %11 = sbr.rel (0) target = $region5
  $region4: #{_forward.1} parent=0 // pred_region
    _
  $region5: #{_forward.1} parent=0 // pred_fallthru
    _
  // Predicated region
  $region6: #{_forward.1} parent=0 // pred_check
    _
  $region7: #{_forward.1} parent=0 // pred_check_branch
    %13 = sbr.rel (0) target = $region9
  $region8: #{_forward.1} parent=0 // pred_region
    _
  $region9: #{_forward.1} parent=0 // pred_fallthru
    _
  // Predicated region
  $region10: #{_forward.1} parent=0 // pred_check
    _
  $region11: #{_forward.1} parent=0 // pred_check_branch
    %15 = sbr.rel (0) target = $region13
  $region12: #{_forward.1} parent=0 // pred_region
    _
  $region13: #{_forward.1} parent=0 // pred_fallthru
    _
  %v16 = vld [vmem:[%s0] sm:$0xff]
  %v17 = vld [vmem:[%s0 + $0x8] sm:$0xff]
  %v18 = vld [vmem:[%s1] sm:$0xff]
  %v19 = vld [vmem:[%s1 + $0x8] sm:$0xff]
  %v20 = vld [vmem:[%s1 + $0x10] sm:$0xff]
  %v21 = vld [vmem:[%s1 + $0x18] sm:$0xff]
  %v22 = vld [vmem:[%s2] sm:$0x1]
  %v24 = vperm.slane %v22, 0
  %vm26 = vcmask 261120
  %v28 = vsel %vm26, %v16, 0
  %v31 = vsel %vm26, %v17, 0
  %33 = vmatpush.msra.mxu0 0.0
  %34 = vmatpush.msra.mxu0 0.0
  %35 = vmatpush.msra.mxu0 0.0
  %36 = vmatpush.msra.mxu0 0.0
  %37 = vmatpush.msra.mxu0 0.0
  %38 = vmatpush.msra.mxu0 0.0
  %39 = vmatpush.msra.mxu0 0.0
  %40 = vmatpush.msra.mxu0 0.0
  %41 = vmatpush.msra.mxu0 0.0
  %42 = vmatpush.msra.mxu0 0.0
  %43 = vmatpush.msra.mxu0 0.0
  %44 = vmatpush.msra.mxu0 0.0
  %45 = vmatpush.msra.mxu0 %v21
  %46 = vmatpush.msra.mxu0 %v20
  %47 = vmatpush.msra.mxu0 %v19
  %48 = vmatpush.msra.mxu0 %v18
  %49 = vmatmul.f32.gmra.mxu0 %v28
  %v50 = vpop.f32.mrf.mxu0
  %v51 = vadd.f32 %v24, %v50
  %52 = vmatmul.f32.gmra.mxu0 %v31
  %v53 = vpop.f32.mrf.mxu0
  %v54 = vadd.f32 %v24, %v53
  %55 = vdwg.mxu0
  %vm56 = vcmask 64512
  %v57 = vsel %vm56, %v51, -inf
  %58 = vmax.xlane.f32.xlu0 %v57
  %v59 = vpop.xlane.xlu0 %58
  %v60 = vsel %vm56, %v54, -inf
  %61 = vmax.xlane.f32.xlu0 %v60
  %v62 = vpop.xlane.xlu0 %61
  %v63 = vsub.f32 %v51, %v59
  %v64 = vsub.f32 %v54, %v62
  %v65 = vmul.f32 %v63, 1.442695
  %v66 = vpow.pop %v65
  %v67 = vmul.f32 %v64, 1.442695
  %v68 = vpow.pop %v67
  %v69 = vsel %vm56, %v66, 0.0
  %70 = vadd.xlane.f32.xlu0 %v69
  %v71 = vpop.xlane.xlu0 %70
  %v72 = vsel %vm56, %v68, 0.0
  %73 = vadd.xlane.f32.xlu0 %v72
  %v74 = vpop.xlane.xlu0 %73
  %v75 = vlaneseq
  %v76 = vand.u32 %v75, 127
  %v77 = vsub.s32 7, %v76
  %v80 = vand.u32 %v66, 4294967288
  %v81 = vand.u32 %v68, 4294967288
  %v82 = vor.u32 %v80, %v77
  %v83 = vor.u32 %v81, %v77
  %v86 = vsel %vm56, %v82, -inf
  %87 = vmax.xlane.f32.xlu0 %v86
  %v88 = vpop.xlane.xlu0 %87
  %v89 = vsel %vm56, %v83, -inf
  %90 = vmax.xlane.f32.xlu0 %v89
  %v91 = vpop.xlane.xlu0 %90
  %v94 = vand.u32 %v88, 7
  %v95 = vand.u32 %v91, 7
  %v96 = vsub.s32 7, %v94
  %v97 = vsub.s32 7, %v95
  %vm98 = vcmp.eq.s32.totalorder %v76, %v96
  %vm99 = vcmp.eq.s32.totalorder %v76, %v97
  %v100 = vsel %vm98, -inf, %v82
  %v101 = vsel %vm99, -inf, %v83
  %v102 = vsel %vm56, %v100, -inf
  %103 = vmax.xlane.f32.xlu0 %v102
  %v104 = vpop.xlane.xlu0 %103
  %v105 = vsel %vm56, %v101, -inf
  %106 = vmax.xlane.f32.xlu0 %v105
  %v107 = vpop.xlane.xlu0 %106
  %v110 = vand.u32 %v104, 7
  %v111 = vand.u32 %v107, 7
  %v112 = vsub.s32 7, %v110
  %v113 = vsub.s32 7, %v111
  %vm114 = vcmp.eq.s32.totalorder %v76, %v112
  %vm115 = vcmp.eq.s32.totalorder %v76, %v113
  %vm116 = vmor %vm98, %vm114
  %vm117 = vmor %vm99, %vm115
  %v118 = vrcp.pop %v71
  %v119 = vmul.f32 %v71, %v118
  %v120 = vsub.f32 1.0, %v119
  %v121 = vmul.f32 %v118, %v120
  %v122 = vadd.f32 %v118, %v121
  %vm123 = vweird.f32 %v71
  %vm124 = vweird.f32 %v118
  %vm125 = vmor %vm123, %vm124
  %v126 = vsel %vm125, %v118, %v122
  %v127 = vand.u32 2147483647, %v71
  %vm128 = vcmp.eq.f32.partialorder %v127, 8.507059e+37
  %v129 = vand.u32 %v71, 2147483648
  %v130 = vor.u32 1.1754944e-38, %v129
  %v131 = vsel %vm128, %v130, %v126
  %v132 = vrcp.pop %v74
  %v133 = vmul.f32 %v74, %v132
  %v134 = vsub.f32 1.0, %v133
  %v135 = vmul.f32 %v132, %v134
  %v136 = vadd.f32 %v132, %v135
  %vm137 = vweird.f32 %v74
  %vm138 = vweird.f32 %v132
  %vm139 = vmor %vm137, %vm138
  %v140 = vsel %vm139, %v132, %v136
  %v141 = vand.u32 2147483647, %v74
  %vm142 = vcmp.eq.f32.partialorder %v141, 8.507059e+37
  %v143 = vand.u32 %v74, 2147483648
  %v144 = vor.u32 1.1754944e-38, %v143
  %v145 = vsel %vm142, %v144, %v140
  %v146 = vmul.f32 %v66, %v131
  %v147 = vmul.f32 %v68, %v145
  %v148 = vsel %vm116, %v146, 0.0
  %v149 = vsel %vm117, %v147, 0.0
  %150 = vst.msk [vmem:[%s3] sm:$0xff] %vm56, %v148
  %151 = vst.msk [vmem:[%s3 + $0x8] sm:$0xff] %vm56, %v149
  %vm152 = vcmp.eq.s32.totalorder %v76, 0
  %v153 = vsel %vm152, 1, 0
  %vm154 = vcmp.eq.s32.totalorder %v153, 1
  %v155 = vsel %vm154, %v96, 0
  %v156 = vsel %vm154, %v97, 0
  %vm157 = vcmp.eq.s32.totalorder %v76, 1
  %v158 = vsel %vm157, 1, 0
  %vm159 = vcmp.eq.s32.totalorder %v158, 1
  %v160 = vsel %vm159, %v112, %v155
  %v161 = vsel %vm159, %v113, %v156
  %vm162 = vcmask 15360
  %163 = vst.msk [vmem:[%s4] sm:$0xff] %vm162, %v160
  %164 = vst.msk [vmem:[%s4 + $0x8] sm:$0xff] %vm162, %v161
  // Predicated region
  $region14: #{_forward.1} parent=0 // pred_check
    _
  $region15: #{_forward.1} parent=0 // pred_check_branch
    %166 = sbr.rel (0) target = $region17
  $region16: #{_forward.1} parent=0 // pred_region
    _
  $region17: #{_forward.1} parent=0 // pred_fallthru
    _
  // Predicated region
  $region18: #{_forward.1} parent=0 // pred_check
    _
  $region19: #{_forward.1} parent=0 // pred_check_branch
    %168 = sbr.rel (0) target = $region21
  $region20: #{_forward.1} parent=0 // pred_region
    _
  $region21: #{_forward.1} parent=0 // pred_fallthru
    _
  // Predicated region
  $region22: #{_forward.1} parent=0 // pred_check
    _
  $region23: #{_forward.1} parent=0 // pred_check_branch
    %170 = sbr.rel (0) target = $region25
  $region24: #{_forward.1} parent=0 // pred_region
    _
  $region25: #{_forward.1} parent=0 // pred_fallthru
    _
  // Predicated region
  $region26: #{_forward.1} parent=0 // pred_check
    _
  $region27: #{_forward.1} parent=0 // pred_check_branch
    %172 = sbr.rel (0) target = $region29
  $region28: #{_forward.1} parent=0 // pred_region
    _
  $region29: #{_forward.1} parent=0 // pred_fallthru
    _

</llo_original>
